<compile_context>
chip_gen: v5e
topology: v5e:2x2
jax: 0.10.0
libtpu: 0.0.40
codegen_flags: <defaults>
</compile_context>

<pallas_src>
import jax
import jax.numpy as jnp
from jax import lax
from jax.experimental import pallas as pl
from jax.experimental.pallas import tpu as pltpu


def fused_mlp_kernel(x_ref, wt_ref, b_ref, o_ref):
    # x: (Bp, 10) native layout; wt: (1, 10); b: (1, 1) in SMEM; o: (1, Bp).
    # Contract over x's last dim (K=10) so the MXU consumes x untransposed and the
    # result stays lane-dense: (1, 10) x (Bp, 10)^T -> (1, Bp).
    y = lax.dot_general(
        wt_ref[...], x_ref[...],
        dimension_numbers=(((1,), (1,)), ((), ())),
        preferred_element_type=jnp.float32,
    )
    o_ref[...] = jax.nn.sigmoid(y + b_ref[0, 0]).astype(o_ref.dtype)


def fuse_params(w1, b1, w2, b2):
    """One-time fold of Linear(10,5) -> Linear(5,1) (no activation between them)."""
    w_eff_t = (w1 @ w2).T            # (1, 10)
    b_eff = b1 @ w2 + b2             # (1, 1)
    return w_eff_t, b_eff


@jax.jit
def simple_nn_forward(x, w_eff_t, b_eff):
    """x: (B, 10); w_eff_t: (1, 10); b_eff: (1, 1) -> (B, 1)."""
    B = x.shape[0]
    Bp = ((B + 127) // 128) * 128    # pad batch (output lane dim) to a 128 multiple

    x_pad = jnp.pad(x, ((0, Bp - B), (0, 0)))   # fused into the jitted program

    y_t = pl.pallas_call(
        fused_mlp_kernel,
        out_shape=jax.ShapeDtypeStruct((1, Bp), jnp.float32),
        in_specs=[
            pl.BlockSpec(memory_space=pltpu.MemorySpace.VMEM),   # x_pad (Bp, 10)
            pl.BlockSpec(memory_space=pltpu.MemorySpace.VMEM),   # w_eff_t (1, 10)
            pl.BlockSpec(memory_space=pltpu.MemorySpace.SMEM),   # b_eff (1, 1) scalar
        ],
        out_specs=pl.BlockSpec(memory_space=pltpu.MemorySpace.VMEM),
    )(x_pad, w_eff_t, b_eff)

    return y_t[:, :B].T              # (B, 1); slice + transpose fused under jit


def init_params(key):
    # Deterministic init mimicking nn.Linear's U(-1/sqrt(fan_in), 1/sqrt(fan_in)).
    k1, k2, k3, k4 = jax.random.split(key, 4)
    lim1 = 1.0 / jnp.sqrt(10.0)
    lim2 = 1.0 / jnp.sqrt(5.0)
    # Stored as (in_features, out_features), i.e. PyTorch weight transposed.
    w1 = jax.random.uniform(k1, (10, 5), jnp.float32, -lim1, lim1)
    b1 = jax.random.uniform(k2, (1, 5), jnp.float32, -lim1, lim1)
    w2 = jax.random.uniform(k3, (5, 1), jnp.float32, -lim2, lim2)
    b2 = jax.random.uniform(k4, (1, 1), jnp.float32, -lim2, lim2)
    return w1, b1, w2, b2


if __name__ == "__main__":
    key = jax.random.PRNGKey(0)
    kx, kp = jax.random.split(key)
    x = jax.random.normal(kx, (100, 10), jnp.float32)
    w1, b1, w2, b2 = init_params(kp)

    # One-time parameter fold (hoisted out of the per-call path).
    w_eff_t, b_eff = fuse_params(w1, b1, w2, b2)

    out = simple_nn_forward(x, w_eff_t, b_eff)
    jax.block_until_ready(out)

    # Pure-JAX reference of the original (unfused) forward pass.
    ref = jax.nn.sigmoid((x @ w1 + b1) @ w2 + b2)
    assert out.shape == (100, 1)
    assert jnp.allclose(out, ref, atol=1e-5), "mismatch vs reference"
    print("KERNEL_OK")
</pallas_src>

<mosaic_0001>
module attributes {stable_mosaic.version = 11 : i64} {
  func.func @fused_mlp_kernel(%arg0: memref<128x10xf32, #tpu.memory_space<vmem>>, %arg1: memref<1x10xf32, #tpu.memory_space<vmem>>, %arg2: memref<1x1xf32, #tpu.memory_space<smem>>, %arg3: memref<1x128xf32, #tpu.memory_space<vmem>>) attributes {dimension_semantics = [], scalar_prefetch = 0 : i64, scratch_operands = 0 : i64, tpu.core_type = #tpu.core_type<tc>} {
    %c0 = arith.constant 0 : index
    %c0_0 = arith.constant 0 : index
    %0 = vector.load %arg1[%c0, %c0_0] : memref<1x10xf32, #tpu.memory_space<vmem>>, vector<1x10xf32>
    %c0_1 = arith.constant 0 : index
    %c0_2 = arith.constant 0 : index
    %1 = vector.load %arg0[%c0_1, %c0_2] : memref<128x10xf32, #tpu.memory_space<vmem>>, vector<128x10xf32>
    %cst = arith.constant dense<0.000000e+00> : vector<1x128xf32>
    %2 = tpu.matmul %0, %1, %cst {dimension_numbers = #tpu.dot_dimension_numbers<[1], [1], [0], [0], [0, 0, 1, 0], [], []>} : vector<1x10xf32>, vector<128x10xf32>, vector<1x128xf32> -> vector<1x128xf32>
    %c0_3 = arith.constant 0 : index
    %c0_4 = arith.constant 0 : index
    %3 = memref.load %arg2[%c0_3, %c0_4] : memref<1x1xf32, #tpu.memory_space<smem>>
    %4 = vector.broadcast %3 : f32 to vector<1x128xf32>
    %5 = arith.addf %2, %4 : vector<1x128xf32>
    %6 = arith.negf %5 : vector<1x128xf32>
    %7 = math.exp %6 : vector<1x128xf32>
    %cst_5 = arith.constant 1.000000e+00 : f32
    %8 = vector.broadcast %cst_5 : f32 to vector<1x128xf32>
    %9 = arith.addf %8, %7 : vector<1x128xf32>
    %10 = arith.divf %8, %9 : vector<1x128xf32>
    %c0_6 = arith.constant 0 : index
    %c0_7 = arith.constant 0 : index
    %11 = vector.load %arg3[%c0_6, %c0_7] : memref<1x128xf32, #tpu.memory_space<vmem>>, vector<1x128xf32>
    tpu.vector_store %arg3[%c0_6, %c0_7], %10 {strides = array<i32>} : memref<1x128xf32, #tpu.memory_space<vmem>>, vector<1x128xf32>,
    return
  }
}

</mosaic_0001>

<llo_original>
// kernel: simple_nn_forward.1
$region0: #{simple_nn_forward.1}
  #allocation0 [shape = 'u32[]', space=smem, size = 0x4, offset = 0x4, fixed_abs, tag = 'smem constant byte address 0x4 - core index']
  #allocation1 [shape = 'u32[72,128]{1,0:T(1,128)}', space=vmem, size = 0x9000, scoped, tag = 'internal scratch']
  #allocation2 [shape = 'f32[1,1]{1,0:T(1,128)S(6)}', space=smem, size = 0x200, scoped, tag = 'scoped memory for simple_nn_forward.1']
  %s0 = inlined_call_operand.vmem [shape: f32[128,10], index: 0, kind: input, shape index: {}]
  %s1 = inlined_call_operand.vmem [shape: f32[1,10], index: 1, kind: input, shape index: {}]
  %s2 = inlined_call_operand.<no memory space> [shape: f32[1,1], index: 2, kind: input, shape index: {}]
  %s3 = inlined_call_operand.vmem [shape: f32[1,128], index: 3, kind: output, shape index: {}]
  %s4 = sld [smem:[#allocation0]]
  $region22: #{simple_nn_forward.1} parent=0
    _
  %s6 = ssub.s32 1, %s4
  %s7 = scalar_select 0, %s6, %s4
  %8 = sst [smem:[#allocation2]] %s2
  // Predicated region
  $region2: #{simple_nn_forward.1} parent=0 // pred_check
    _
  $region3: #{simple_nn_forward.1} parent=0 // pred_check_branch
    %10 = sbr.rel (0) target = $region5
  $region4: #{simple_nn_forward.1} parent=0 // pred_region
    _
  $region5: #{simple_nn_forward.1} parent=0 // pred_fallthru
    _
  // Predicated region
  $region6: #{simple_nn_forward.1} parent=0 // pred_check
    _
  $region7: #{simple_nn_forward.1} parent=0 // pred_check_branch
    %12 = sbr.rel (0) target = $region9
  $region8: #{simple_nn_forward.1} parent=0 // pred_region
    _
  $region9: #{simple_nn_forward.1} parent=0 // pred_fallthru
    _
  // Predicated region
  $region10: #{simple_nn_forward.1} parent=0 // pred_check
    _
  $region11: #{simple_nn_forward.1} parent=0 // pred_check_branch
    %14 = sbr.rel (0) target = $region13
  $region12: #{simple_nn_forward.1} parent=0 // pred_region
    _
  $region13: #{simple_nn_forward.1} parent=0 // pred_fallthru
    _
  %v15 = vld [vmem:[%s1] sm:$0x1]
  %v16 = vld [vmem:[%s0] sm:$0xff]
  %v17 = vld [vmem:[%s0 + $0x8] sm:$0xff]
  %v18 = vld [vmem:[%s0 + $0x10] sm:$0xff]
  %v19 = vld [vmem:[%s0 + $0x18] sm:$0xff]
  %v20 = vld [vmem:[%s0 + $0x20] sm:$0xff]
  %v21 = vld [vmem:[%s0 + $0x28] sm:$0xff]
  %v22 = vld [vmem:[%s0 + $0x30] sm:$0xff]
  %v23 = vld [vmem:[%s0 + $0x38] sm:$0xff]
  %v24 = vld [vmem:[%s0 + $0x40] sm:$0xff]
  %v25 = vld [vmem:[%s0 + $0x48] sm:$0xff]
  %v26 = vld [vmem:[%s0 + $0x50] sm:$0xff]
  %v27 = vld [vmem:[%s0 + $0x58] sm:$0xff]
  %v28 = vld [vmem:[%s0 + $0x60] sm:$0xff]
  %v29 = vld [vmem:[%s0 + $0x68] sm:$0xff]
  %v30 = vld [vmem:[%s0 + $0x70] sm:$0xff]
  %v31 = vld [vmem:[%s0 + $0x78] sm:$0xff]
  %s32 = sld [smem:[#allocation2]]
  %v33 = vstv %s32
  %vm34 = vcmask 80896
  %v36 = vsel %vm34, %v15, 0
  %v39 = vsel %vm34, %v16, 0
  %v42 = vsel %vm34, %v17, 0
  %v45 = vsel %vm34, %v18, 0
  %v48 = vsel %vm34, %v19, 0
  %v51 = vsel %vm34, %v20, 0
  %v54 = vsel %vm34, %v21, 0
  %v57 = vsel %vm34, %v22, 0
  %v60 = vsel %vm34, %v23, 0
  %v63 = vsel %vm34, %v24, 0
  %v66 = vsel %vm34, %v25, 0
  %v69 = vsel %vm34, %v26, 0
  %v72 = vsel %vm34, %v27, 0
  %v75 = vsel %vm34, %v28, 0
  %v78 = vsel %vm34, %v29, 0
  %v81 = vsel %vm34, %v30, 0
  %v84 = vsel %vm34, %v31, 0
  %86 = vmatpush.xpose.msra.mxu0 %v84
  %87 = vmatpush.xpose.msra.mxu0 %v81
  %88 = vmatpush.xpose.msra.mxu0 %v78
  %89 = vmatpush.xpose.msra.mxu0 %v75
  %90 = vmatpush.xpose.msra.mxu0 %v72
  %91 = vmatpush.xpose.msra.mxu0 %v69
  %92 = vmatpush.xpose.msra.mxu0 %v66
  %93 = vmatpush.xpose.msra.mxu0 %v63
  %94 = vmatpush.xpose.msra.mxu0 %v60
  %95 = vmatpush.xpose.msra.mxu0 %v57
  %96 = vmatpush.xpose.msra.mxu0 %v54
  %97 = vmatpush.xpose.msra.mxu0 %v51
  %98 = vmatpush.xpose.msra.mxu0 %v48
  %99 = vmatpush.xpose.msra.mxu0 %v45
  %100 = vmatpush.xpose.msra.mxu0 %v42
  %101 = vmatpush.xpose.msra.mxu0 %v39
  %102 = vmatmul.f32.gmra.mxu0 %v36
  %v103 = vpop.f32.mrf.mxu0
  %v104 = vadd.f32 %v33, %v103
  %105 = vdwg.mxu0
  %v106 = vxor.u32 %v104, 2147483648
  %v107 = vmul.f32 %v106, 1.442695
  %v108 = vpow.pop %v107
  %v109 = vadd.f32 %v108, 1.0
  %v110 = vrcp.pop %v109
  %v111 = vmul.f32 %v109, %v110
  %v112 = vsub.f32 1.0, %v111
  %v113 = vmul.f32 %v110, %v112
  %v114 = vadd.f32 %v110, %v113
  %vm115 = vweird.f32 %v109
  %vm116 = vweird.f32 %v110
  %vm117 = vmor %vm115, %vm116
  %v118 = vsel %vm117, %v110, %v114
  %v119 = vand.u32 2147483647, %v109
  %vm120 = vcmp.eq.f32.partialorder %v119, 8.507059e+37
  %v121 = vand.u32 %v109, 2147483648
  %v122 = vor.u32 1.1754944e-38, %v121
  %v123 = vsel %vm120, %v122, %v118
  %v124 = vmul.f32 1.0, %v123
  %125 = vst [vmem:[%s3] sm:$0x1] %v124
  // Predicated region
  $region14: #{simple_nn_forward.1} parent=0 // pred_check
    _
  $region15: #{simple_nn_forward.1} parent=0 // pred_check_branch
    %127 = sbr.rel (0) target = $region17
  $region16: #{simple_nn_forward.1} parent=0 // pred_region
    _
  $region17: #{simple_nn_forward.1} parent=0 // pred_fallthru
    _
  // Predicated region
  $region18: #{simple_nn_forward.1} parent=0 // pred_check
    _
  $region19: #{simple_nn_forward.1} parent=0 // pred_check_branch
    %129 = sbr.rel (0) target = $region21
  $region20: #{simple_nn_forward.1} parent=0 // pred_region
    _
  $region21: #{simple_nn_forward.1} parent=0 // pred_fallthru
    _

</llo_original>
